<compile_context>
chip_gen: v7x
topology: tpu7x:2x2x1
jax: 0.10.0
libtpu: 0.0.40
codegen_flags: <defaults>
</compile_context>

<pallas_src>
import functools
import math

import jax
import jax.numpy as jnp
from jax.experimental import pallas as pl
from jax.experimental.pallas import tpu as pltpu

LN_EPS = 1e-5          # torch.nn.LayerNorm default
_LANE = 128
_SUBLANE = 8


def _round_up(x, m):
    return (x + m - 1) // m * m


def _vmem_budget():
    """~80% of this generation's per-core VMEM (v5e/v6e: 128 MiB, v7x: 64 MiB)."""
    cap = 64 << 20                                     # conservative fallback (v7x)
    try:
        cap = int(pltpu.get_tpu_info().vmem_capacity_bytes) or cap
    except Exception:
        pass
    return cap * 4 // 5


@functools.lru_cache(maxsize=None)
def _single_buffering_supported():
    """Probe whether pipeline_mode=pl.Buffered(1) works on this JAX/Mosaic build."""
    try:
        def k(x_ref, o_ref):
            o_ref[...] = x_ref[...]
        spec = pl.BlockSpec((8, 128), lambda i: (0, 0), pipeline_mode=pl.Buffered(1))
        out = pl.pallas_call(
            k,
            out_shape=jax.ShapeDtypeStruct((8, 128), jnp.float32),
            grid=(1,),
            in_specs=[spec],
            out_specs=pl.BlockSpec((8, 128), lambda i: (0, 0)),
        )(jnp.zeros((8, 128), jnp.float32))
        jax.block_until_ready(out)
        return True
    except Exception:
        return False


def _resident_spec(shape, index_map):
    """Spec for a VMEM-resident (constant-index) operand; single-buffered if possible."""
    if _single_buffering_supported():
        return pl.BlockSpec(shape, index_map, pipeline_mode=pl.Buffered(1))
    return pl.BlockSpec(shape, index_map)


def _resmlp_kernel(x_ref, w1_ref, b1_ref, w2_ref, b2_ref, g_ref, beta_ref,
                   o_ref, *scratch, residual, eps):
    single_k = not scratch
    x = x_ref[...]

    # Both matmuls run on the MXU in the weight storage dtype (bf16 MXU path when the
    # weights are bf16, even if x arrives as f32); accumulation stays f32.
    h = jnp.dot(x.astype(w1_ref.dtype), w1_ref[...],
                preferred_element_type=jnp.float32)
    h = jnp.maximum(h + b1_ref[...].astype(jnp.float32), 0.0)
    part = jnp.dot(h.astype(w2_ref.dtype), w2_ref[...],
                   preferred_element_type=jnp.float32)

    def epilogue(y):
        y = y + b2_ref[...].astype(jnp.float32)
        # LayerNorm over the true emb; two-pass variance, affine folded into the scale.
        mean = jnp.mean(y, axis=-1, keepdims=True)
        d = y - mean
        var = jnp.mean(d * d, axis=-1, keepdims=True)
        scale = jax.lax.rsqrt(var + eps) * g_ref[...].astype(jnp.float32)
        out = d * scale + beta_ref[...].astype(jnp.float32)
        if residual:
            out = out + x.astype(jnp.float32)
        o_ref[...] = out.astype(o_ref.dtype)

    if single_k:                       # all weights VMEM-resident: no reduction axis
        epilogue(part)
    else:                              # bottleneck streamed: accumulate partial y
        acc_ref, = scratch
        j = pl.program_id(1)

        @pl.when(j == 0)
        def _():
            acc_ref[...] = jnp.zeros_like(acc_ref)

        acc_ref[...] += part

        @pl.when(j == pl.num_programs(1) - 1)
        def _():
            epilogue(acc_ref[...])


def resmlp_forward(x, params, *, residual=False, block_rows=None, block_bot=None):
    """x: (..., emb). params: w1 (emb,bot), b1 (1,bot), w2 (bot,emb), b2/gamma/beta (1,emb).
    nn.Linear weights are stored transposed so the kernel computes x @ w + b."""
    emb = x.shape[-1]
    lead = x.shape[:-1]
    rows = math.prod(lead) if lead else 1

    w1, b1, w2, b2, gamma, beta = (params["w1"], params["b1"], params["w2"],
                                   params["b2"], params["gamma"], params["beta"])
    bot = w1.shape[1]

    x2d = x.reshape(rows, emb)
    x_isz = x.dtype.itemsize
    w_isz = w1.dtype.itemsize
    budget = _vmem_budget()

    def footprint(tm, tk, nk):
        wbuf = 1 if (nk == 1 and _single_buffering_supported()) else 2
        wbytes = wbuf * (2 * emb * tk + tk) * w_isz + 3 * emb * w_isz   # w1,w2,b1 + b2,g,beta
        io = 2 * tm * emb * 2 * x_isz                                   # dbl-buffered x + out
        interm = tm * tk * (4 + w_isz)                                  # f32 h + cast copy
        interm += 2 * tm * emb * 4                                      # f32 y + accumulator
        return wbytes + io + interm

    # ---- row tile: ~2 MiB per x tile, multiple of 8, >=2 grid steps (v7x megacore) ----
    if block_rows is None:
        block_rows = min(8192, max(_SUBLANE, (2 << 20) // max(1, emb * x_isz)))
    two_step_cap = max(_SUBLANE, _round_up(pl.cdiv(rows, 2), _SUBLANE))
    tm = max(_SUBLANE, min(_round_up(block_rows, _SUBLANE), two_step_cap,
                           _round_up(rows, _SUBLANE)))

    # ---- bottleneck tile: keep all weights VMEM-resident when they fit the budget ----
    tk, nk = bot, 1
    if block_bot is not None and block_bot < bot:
        tk = max(_LANE, _round_up(block_bot, _LANE))
        nk = pl.cdiv(bot, tk)
        if nk == 1:
            tk = bot
    else:
        while tm > 256 and footprint(tm, tk, nk) > budget:        # shrink rows first
            tm = max(256, _round_up(tm // 2, _SUBLANE))
        if footprint(tm, tk, nk) > budget and bot > _LANE:        # stream bottleneck slices
            tk = _round_up(bot, _LANE)
            while tk > _LANE and footprint(tm, tk, 2) > budget:
                tk = max(_LANE, _round_up(tk // 2, _LANE))
            nk = pl.cdiv(bot, tk)
            if nk == 1:
                tk = bot
    while tm > _SUBLANE and footprint(tm, tk, nk) > budget:        # last resort
        tm = max(_SUBLANE, _round_up(tm // 2, _SUBLANE))
    # TODO(synk): also tile emb (the N axis) for models whose (emb,tk)+(tk,emb) slices
    # alone exceed the VMEM budget at tk=128.

    # Zero-pad the bottleneck so it splits evenly into tk-wide slices (pad cols of w1/b1
    # give h == 0 and the matching zero rows of w2 contribute nothing -> exact).
    bot_p = nk * tk
    if bot_p != bot:
        w1 = jnp.pad(w1, ((0, 0), (0, bot_p - bot)))
        b1 = jnp.pad(b1, ((0, 0), (0, bot_p - bot)))
        w2 = jnp.pad(w2, ((0, bot_p - bot), (0, 0)))

    gm = pl.cdiv(rows, tm)
    kernel = functools.partial(_resmlp_kernel, residual=residual, eps=LN_EPS)

    if nk == 1:
        grid = (gm,)
        in_specs = [
            pl.BlockSpec((tm, emb), lambda i: (i, 0)),       # x (streamed over rows)
            _resident_spec((emb, tk), lambda i: (0, 0)),     # w1 (VMEM-resident)
            _resident_spec((1, tk), lambda i: (0, 0)),       # b1
            _resident_spec((tk, emb), lambda i: (0, 0)),     # w2
            _resident_spec((1, emb), lambda i: (0, 0)),      # b2
            _resident_spec((1, emb), lambda i: (0, 0)),      # gamma
            _resident_spec((1, emb), lambda i: (0, 0)),      # beta
        ]
        out_specs = pl.BlockSpec((tm, emb), lambda i: (i, 0))
        scratch_shapes = ()
        dims = ("parallel",)
    else:
        grid = (gm, nk)
        in_specs = [
            pl.BlockSpec((tm, emb), lambda i, j: (i, 0)),    # x (resident across K axis)
            pl.BlockSpec((emb, tk), lambda i, j: (0, j)),    # w1 slice (streamed)
            pl.BlockSpec((1, tk), lambda i, j: (0, j)),      # b1 slice
            pl.BlockSpec((tk, emb), lambda i, j: (j, 0)),    # w2 slice
            _resident_spec((1, emb), lambda i, j: (0, 0)),   # b2
            _resident_spec((1, emb), lambda i, j: (0, 0)),   # gamma
            _resident_spec((1, emb), lambda i, j: (0, 0)),   # beta
        ]
        out_specs = pl.BlockSpec((tm, emb), lambda i, j: (i, 0))
        scratch_shapes = (pltpu.VMEM((tm, emb), jnp.float32),)
        dims = ("parallel", "arbitrary")

    vmem_limit = int(min(max(footprint(tm, tk, nk) * 3 // 2, 16 << 20), budget))

    out2d = pl.pallas_call(
        kernel,
        out_shape=jax.ShapeDtypeStruct((rows, emb), x.dtype),
        grid_spec=pltpu.PrefetchScalarGridSpec(
            num_scalar_prefetch=0,
            grid=grid,
            in_specs=in_specs,
            out_specs=out_specs,
            scratch_shapes=scratch_shapes,
        ),
        compiler_params=pltpu.CompilerParams(
            dimension_semantics=dims,
            vmem_limit_bytes=vmem_limit,
        ),
    )(x2d, w1, b1, w2, b2, gamma, beta)

    return out2d.reshape(*lead, emb)


def init_params(key, emb_dimension, bottleneck_size, dtype=jnp.float32):
    """Deterministic synthetic init matching the nn.Module parameter shapes.
    Store weights in bf16 (dtype=jnp.bfloat16) to use the bf16 MXU path."""
    k1, k2, k3, k4 = jax.random.split(key, 4)
    # nn.Linear(emb, bottleneck): weight (bottleneck, emb) -> stored transposed
    w1 = (jax.random.uniform(k1, (emb_dimension, bottleneck_size), dtype,
                             minval=-1.0, maxval=1.0) / jnp.sqrt(emb_dimension))
    b1 = jax.random.uniform(k2, (1, bottleneck_size), dtype, minval=-0.1, maxval=0.1)
    # nn.Linear(bottleneck, emb): stored transposed (bottleneck, emb)
    w2 = (jax.random.uniform(k3, (bottleneck_size, emb_dimension), dtype,
                             minval=-1.0, maxval=1.0) / jnp.sqrt(bottleneck_size))
    b2 = jax.random.uniform(k4, (1, emb_dimension), dtype, minval=-0.1, maxval=0.1)
    # nn.LayerNorm(emb) default init: gamma = 1, beta = 0
    gamma = jnp.ones((1, emb_dimension), dtype)
    beta = jnp.zeros((1, emb_dimension), dtype)
    return dict(w1=w1, b1=b1, w2=w2, b2=b2, gamma=gamma, beta=beta)


def _reference(x, params, residual=False):
    """Pure-JAX reference mirroring the PyTorch module semantics."""
    hp = jax.lax.Precision.HIGHEST
    h = jnp.maximum(jnp.dot(x, params["w1"], precision=hp) + params["b1"][0], 0.0)
    y = jnp.dot(h, params["w2"], precision=hp) + params["b2"][0]
    mean = jnp.mean(y, axis=-1, keepdims=True)
    var = jnp.mean((y - mean) ** 2, axis=-1, keepdims=True)
    out = (y - mean) / jnp.sqrt(var + LN_EPS) * params["gamma"][0] + params["beta"][0]
    if residual:
        out = out + x
    return out


if __name__ == "__main__":
    key = jax.random.PRNGKey(0)
    k1, k2, k3, k4 = jax.random.split(key, 4)

    # --- primary config (MLP1 + ReLU + LayerNorm): batch=2, seq=8, emb=32, bottleneck=16
    batch, seq, emb, bottleneck = 2, 8, 32, 16
    x = jax.random.normal(k1, (batch, seq, emb), jnp.float32)
    params = init_params(k2, emb_dimension=emb, bottleneck_size=bottleneck)

    out = jax.block_until_ready(resmlp_forward(x, params, residual=False))
    ref = _reference(x, params, residual=False)
    assert out.shape == (batch, seq, emb)
    assert jnp.allclose(out, ref, atol=1e-4, rtol=1e-4), "mismatch (MLP1, residual=False)"

    # residual=True variant of the same module
    out_r = jax.block_until_ready(resmlp_forward(x, params, residual=True))
    ref_r = _reference(x, params, residual=True)
    assert jnp.allclose(out_r, ref_r, atol=1e-4, rtol=1e-4), "mismatch (residual=True)"

    # bf16-stored weights exercise the bf16 MXU path (LN math stays f32 in-kernel)
    params_bf16 = jax.tree_util.tree_map(lambda a: a.astype(jnp.bfloat16), params)
    out_bf = jax.block_until_ready(resmlp_forward(x, params_bf16, residual=False))
    assert jnp.allclose(out_bf.astype(jnp.float32), ref, atol=1e-1, rtol=1e-1), \
        "mismatch (bf16 weights)"

    # --- exercise the streamed-weight (bottleneck-tiled) path + partial row tiles ---
    batch2, seq2, emb2, bottleneck2 = 3, 5, 64, 256
    x2 = jax.random.normal(k3, (batch2, seq2, emb2), jnp.float32)
    params2 = init_params(k4, emb_dimension=emb2, bottleneck_size=bottleneck2)
    out2 = jax.block_until_ready(
        resmlp_forward(x2, params2, residual=False, block_rows=8, block_bot=128))
    ref2 = _reference(x2, params2, residual=False)
    assert jnp.allclose(out2, ref2, atol=1e-3, rtol=1e-3), "mismatch (bottleneck-tiled)"

    print("KERNEL_OK")
</pallas_src>

<mosaic_0001>
module attributes {stable_mosaic.version = 11 : i64} {
  func.func @k(%arg0: i32, %arg1: memref<8x128xf32, #tpu.memory_space<vmem>>, %arg2: memref<8x128xf32, #tpu.memory_space<vmem>>) attributes {dimension_semantics = [#tpu.dimension_semantics<arbitrary>], iteration_bounds = array<i64: 1>, scalar_prefetch = 0 : i64, scratch_operands = 0 : i64, tpu.core_type = #tpu.core_type<tc>, window_params = [{pipeline_mode = #tpu.pipeline_mode<synchronous>, transform_indices = @transform_0, window_bounds = array<i64: 8, 128>}, {pipeline_mode = #tpu.pipeline_mode<synchronous>, transform_indices = @transform_1, window_bounds = array<i64: 8, 128>}]} {
    %c0 = arith.constant 0 : index
    %c0_0 = arith.constant 0 : index
    %0 = vector.load %arg1[%c0, %c0_0] : memref<8x128xf32, #tpu.memory_space<vmem>>, vector<8x128xf32>
    %c0_1 = arith.constant 0 : index
    %c0_2 = arith.constant 0 : index
    %1 = vector.load %arg2[%c0_1, %c0_2] : memref<8x128xf32, #tpu.memory_space<vmem>>, vector<8x128xf32>
    tpu.vector_store %arg2[%c0_1, %c0_2], %0 {strides = array<i32>} : memref<8x128xf32, #tpu.memory_space<vmem>>, vector<8x128xf32>,
    return
  }
  func.func @transform_0(%arg0: i32) -> (i32, i32) {
    %c0_i32 = arith.constant 0 : i32
    %c0_i32_0 = arith.constant 0 : i32
    %c0_i32_1 = arith.constant 0 : i32
    return %c0_i32, %c0_i32_0 : i32, i32
  }
  func.func @transform_1(%arg0: i32) -> (i32, i32) {
    %c0_i32 = arith.constant 0 : i32
    %c0_i32_0 = arith.constant 0 : i32
    %c0_i32_1 = arith.constant 0 : i32
    return %c0_i32, %c0_i32_0 : i32, i32
  }
}

module attributes {stable_mosaic.version = 11 : i64} {
  func.func @_resmlp_kernel(%arg0: i32, %arg1: memref<8x32xf32, #tpu.memory_space<vmem>>, %arg2: memref<32x16xf32, #tpu.memory_space<vmem>>, %arg3: memref<1x16xf32, #tpu.memory_space<vmem>>, %arg4: memref<16x32xf32, #tpu.memory_space<vmem>>, %arg5: memref<1x32xf32, #tpu.memory_space<vmem>>, %arg6: memref<1x32xf32, #tpu.memory_space<vmem>>, %arg7: memref<1x32xf32, #tpu.memory_space<vmem>>, %arg8: memref<8x32xf32, #tpu.memory_space<vmem>>) attributes {dimension_semantics = [#tpu.dimension_semantics<parallel>], iteration_bounds = array<i64: 2>, scalar_prefetch = 0 : i64, scratch_operands = 0 : i64, tpu.core_type = #tpu.core_type<tc>, window_params = [{transform_indices = @transform_0, window_bounds = array<i64: 8, 32>}, {pipeline_mode = #tpu.pipeline_mode<synchronous>, transform_indices = @transform_1, window_bounds = array<i64: 32, 16>}, {pipeline_mode = #tpu.pipeline_mode<synchronous>, transform_indices = @transform_2, window_bounds = array<i64: 1, 16>}, {pipeline_mode = #tpu.pipeline_mode<synchronous>, transform_indices = @transform_3, window_bounds = array<i64: 16, 32>}, {pipeline_mode = #tpu.pipeline_mode<synchronous>, transform_indices = @transform_4, window_bounds = array<i64: 1, 32>}, {pipeline_mode = #tpu.pipeline_mode<synchronous>, transform_indices = @transform_5, window_bounds = array<i64: 1, 32>}, {pipeline_mode = #tpu.pipeline_mode<synchronous>, transform_indices = @transform_6, window_bounds = array<i64: 1, 32>}, {transform_indices = @transform_7, window_bounds = array<i64: 8, 32>}]} {
    %c0 = arith.constant 0 : index
    %c0_0 = arith.constant 0 : index
    %0 = vector.load %arg1[%c0, %c0_0] : memref<8x32xf32, #tpu.memory_space<vmem>>, vector<8x32xf32>
    %c0_1 = arith.constant 0 : index
    %c0_2 = arith.constant 0 : index
    %1 = vector.load %arg2[%c0_1, %c0_2] : memref<32x16xf32, #tpu.memory_space<vmem>>, vector<32x16xf32>
    %cst = arith.constant dense<0.000000e+00> : vector<8x16xf32>
    %2 = tpu.matmul %0, %1, %cst {dimension_numbers = #tpu.dot_dimension_numbers<[1], [0], [0], [1], [0, 0, 1, 1], [], []>} : vector<8x32xf32>, vector<32x16xf32>, vector<8x16xf32> -> vector<8x16xf32>
    %c0_3 = arith.constant 0 : index
    %c0_4 = arith.constant 0 : index
    %3 = vector.load %arg3[%c0_3, %c0_4] : memref<1x16xf32, #tpu.memory_space<vmem>>, vector<1x16xf32>
    %4 = vector.broadcast %3 : vector<1x16xf32> to vector<8x16xf32>
    %5 = arith.addf %2, %4 : vector<8x16xf32>
    %cst_5 = arith.constant 0.000000e+00 : f32
    %6 = vector.broadcast %cst_5 : f32 to vector<8x16xf32>
    %7 = arith.maximumf %5, %6 : vector<8x16xf32>
    %c0_6 = arith.constant 0 : index
    %c0_7 = arith.constant 0 : index
    %8 = vector.load %arg4[%c0_6, %c0_7] : memref<16x32xf32, #tpu.memory_space<vmem>>, vector<16x32xf32>
    %cst_8 = arith.constant dense<0.000000e+00> : vector<8x32xf32>
    %9 = tpu.matmul %7, %8, %cst_8 {dimension_numbers = #tpu.dot_dimension_numbers<[1], [0], [0], [1], [0, 0, 1, 1], [], []>} : vector<8x16xf32>, vector<16x32xf32>, vector<8x32xf32> -> vector<8x32xf32>
    %c0_9 = arith.constant 0 : index
    %c0_10 = arith.constant 0 : index
    %10 = vector.load %arg5[%c0_9, %c0_10] : memref<1x32xf32, #tpu.memory_space<vmem>>, vector<1x32xf32>
    %11 = vector.broadcast %10 : vector<1x32xf32> to vector<8x32xf32>
    %12 = arith.addf %9, %11 : vector<8x32xf32>
    %cst_11 = arith.constant dense<0.000000e+00> : vector<8xf32>
    %13 = vector.multi_reduction <add>, %12, %cst_11 [1] : vector<8x32xf32> to vector<8xf32>
    %14 = vector.shape_cast %13 : vector<8xf32> to vector<8x1xf32>
    %cst_12 = arith.constant 3.200000e+01 : f32
    %15 = vector.broadcast %cst_12 : f32 to vector<8x1xf32>
    %16 = arith.divf %14, %15 : vector<8x1xf32>
    %17 = vector.broadcast %16 : vector<8x1xf32> to vector<8x32xf32>
    %18 = arith.subf %12, %17 : vector<8x32xf32>
    %19 = arith.mulf %18, %18 : vector<8x32xf32>
    %cst_13 = arith.constant dense<0.000000e+00> : vector<8xf32>
    %20 = vector.multi_reduction <add>, %19, %cst_13 [1] : vector<8x32xf32> to vector<8xf32>
    %21 = vector.shape_cast %20 : vector<8xf32> to vector<8x1xf32>
    %cst_14 = arith.constant 3.200000e+01 : f32
    %22 = vector.broadcast %cst_14 : f32 to vector<8x1xf32>
    %23 = arith.divf %21, %22 : vector<8x1xf32>
    %cst_15 = arith.constant 9.99999974E-6 : f32
    %24 = vector.broadcast %cst_15 : f32 to vector<8x1xf32>
    %25 = arith.addf %23, %24 : vector<8x1xf32>
    %26 = math.rsqrt %25 : vector<8x1xf32>
    %c0_16 = arith.constant 0 : index
    %c0_17 = arith.constant 0 : index
    %27 = vector.load %arg6[%c0_16, %c0_17] : memref<1x32xf32, #tpu.memory_space<vmem>>, vector<1x32xf32>
    %28 = vector.broadcast %26 : vector<8x1xf32> to vector<8x32xf32>
    %29 = vector.broadcast %27 : vector<1x32xf32> to vector<8x32xf32>
    %30 = arith.mulf %28, %29 : vector<8x32xf32>
    %31 = arith.mulf %18, %30 : vector<8x32xf32>
    %c0_18 = arith.constant 0 : index
    %c0_19 = arith.constant 0 : index
    %32 = vector.load %arg7[%c0_18, %c0_19] : memref<1x32xf32, #tpu.memory_space<vmem>>, vector<1x32xf32>
    %33 = vector.broadcast %32 : vector<1x32xf32> to vector<8x32xf32>
    %34 = arith.addf %31, %33 : vector<8x32xf32>
    %c0_20 = arith.constant 0 : index
    %c0_21 = arith.constant 0 : index
    %35 = vector.load %arg8[%c0_20, %c0_21] : memref<8x32xf32, #tpu.memory_space<vmem>>, vector<8x32xf32>
    tpu.vector_store %arg8[%c0_20, %c0_21], %34 {strides = array<i32>} : memref<8x32xf32, #tpu.memory_space<vmem>>, vector<8x32xf32>,
    return
  }
  func.func @transform_0(%arg0: i32) -> (i32, i32) {
    %c0_i32 = arith.constant 0 : i32
    %c0_i32_0 = arith.constant 0 : i32
    return %arg0, %c0_i32 : i32, i32
  }
  func.func @transform_1(%arg0: i32) -> (i32, i32) {
    %c0_i32 = arith.constant 0 : i32
    %c0_i32_0 = arith.constant 0 : i32
    %c0_i32_1 = arith.constant 0 : i32
    return %c0_i32, %c0_i32_0 : i32, i32
  }
  func.func @transform_2(%arg0: i32) -> (i32, i32) {
    %c0_i32 = arith.constant 0 : i32
    %c0_i32_0 = arith.constant 0 : i32
    %c0_i32_1 = arith.constant 0 : i32
    return %c0_i32, %c0_i32_0 : i32, i32
  }
  func.func @transform_3(%arg0: i32) -> (i32, i32) {
    %c0_i32 = arith.constant 0 : i32
    %c0_i32_0 = arith.constant 0 : i32
    %c0_i32_1 = arith.constant 0 : i32
    return %c0_i32, %c0_i32_0 : i32, i32
  }
  func.func @transform_4(%arg0: i32) -> (i32, i32) {
    %c0_i32 = arith.constant 0 : i32
    %c0_i32_0 = arith.constant 0 : i32
    %c0_i32_1 = arith.constant 0 : i32
    return %c0_i32, %c0_i32_0 : i32, i32
  }
  func.func @transform_5(%arg0: i32) -> (i32, i32) {
    %c0_i32 = arith.constant 0 : i32
    %c0_i32_0 = arith.constant 0 : i32
    %c0_i32_1 = arith.constant 0 : i32
    return %c0_i32, %c0_i32_0 : i32, i32
  }
  func.func @transform_6(%arg0: i32) -> (i32, i32) {
    %c0_i32 = arith.constant 0 : i32
    %c0_i32_0 = arith.constant 0 : i32
    %c0_i32_1 = arith.constant 0 : i32
    return %c0_i32, %c0_i32_0 : i32, i32
  }
  func.func @transform_7(%arg0: i32) -> (i32, i32) {
    %c0_i32 = arith.constant 0 : i32
    %c0_i32_0 = arith.constant 0 : i32
    return %arg0, %c0_i32 : i32, i32
  }
}

</mosaic_0001>

<llo_original>
// kernel: tpu_custom_call.1
$region0: #{tpu_custom_call.1}
  #allocation0 [shape = 'u32[]', space=smem, size = 0x4, offset = 0x4, fixed_abs, tag = 'smem constant byte address 0x4 - core index']
  #allocation1 [shape = 'u32[144,128]{1,0:T(1,128)}', space=vmem, size = 0x12000, scoped, tag = 'internal scratch']
  %s0 = inlined_call_operand.hbm [shape: f32[8,128], index: 0, kind: input, shape index: {}]
  %s1 = inlined_call_operand.hbm [shape: f32[8,128], index: 1, kind: output, shape index: {}]
  %s2 = sld [smem:[#allocation0]]
  $region18: #{tpu_custom_call.1} parent=0
    _
  %s4 = ssub.s32 1, %s2
  %s5 = scalar_select 0, %s4, %s2
  $region1: #{tpu_custom_call.1} parent=0
    #allocation2 [shape = 'u8[4096]{0}', space=vmem, size = 0x1000, scoped, tag = 'input window, operand 0, single buffered']
    #allocation3 [shape = 's32[1]{0}', space=sflag, size = 0x4, scoped, tag = 'scoped memory for tpu_custom_call.1']
    #allocation4 [shape = 's32[1]{0}', space=sflag, size = 0x4, scoped, tag = 'scoped memory for tpu_custom_call.1']
    #allocation5 [shape = 'u8[4096]{0}', space=vmem, size = 0x1000, scoped, tag = 'output window, operand 0, single buffered']
    %6 = vsyncpa [#allocation3], 0
    %7 = vsyncpa [#allocation4], 0
    // Predicated region
    $region2: #{tpu_custom_call.1} parent=1 // pred_check
      _
    $region3: #{tpu_custom_call.1} parent=1 // pred_check_branch
      %9 = sbr.rel (0) target = $region5
    $region4: #{tpu_custom_call.1} parent=1 // pred_region
      %s11 = ssub.s32 128, 128
      %12 = vsyncadd [#allocation3], %s11
      %s14 = sshll.u32 [#allocation2], 4
      %s15 = int_to_ptr.vmem [resolvable:$true] %s14
      %17 = dma.hbm_to_vmem [thread:$0]  %s0, 128, %s15, [#allocation3]
    $region5: #{tpu_custom_call.1} parent=1 // pred_fallthru
      _
    // Predicated region
    $region6: #{tpu_custom_call.1} parent=1 // pred_check
      _
    $region7: #{tpu_custom_call.1} parent=1 // pred_check_branch
      %19 = sbr.rel (0) target = $region9
    $region8: #{tpu_custom_call.1} parent=1 // pred_region
      %20 = dma.done [#allocation3], 128
    $region9: #{tpu_custom_call.1} parent=1 // pred_fallthru
      _
    %v21 = vld [vmem:[#allocation2] sm:$0xff]
    %22 = vst [vmem:[#allocation5] sm:$0xff] %v21
    // Predicated region
    $region10: #{tpu_custom_call.1} parent=1 // pred_check
      _
    $region11: #{tpu_custom_call.1} parent=1 // pred_check_branch
      %24 = sbr.rel (0) target = $region13
    $region12: #{tpu_custom_call.1} parent=1 // pred_region
      %s26 = ssub.s32 128, 128
      %27 = vsyncadd [#allocation4], %s26
      %s29 = sshll.u32 [#allocation5], 4
      %s30 = int_to_ptr.vmem [resolvable:$true] %s29
      %32 = dma.vmem_to_hbm [thread:$0]  %s30, 128, %s1, [#allocation4]
    $region13: #{tpu_custom_call.1} parent=1 // pred_fallthru
      _
    // Predicated region
    $region14: #{tpu_custom_call.1} parent=1 // pred_check
      _
    $region15: #{tpu_custom_call.1} parent=1 // pred_check_branch
      %34 = sbr.rel (0) target = $region17
    $region16: #{tpu_custom_call.1} parent=1 // pred_region
      %35 = dma.done [#allocation4], 128
    $region17: #{tpu_custom_call.1} parent=1 // pred_fallthru
      _
    %36 = vsyncpa [#allocation3], 1
    %37 = vsyncpa [#allocation4], 1

// kernel: tpu_custom_call.1
$region0: #{tpu_custom_call.1}
  #allocation0 [shape = 'u32[]', space=smem, size = 0x4, offset = 0x4, fixed_abs, tag = 'smem constant byte address 0x4 - core index']
  #allocation1 [shape = 'u32[144,128]{1,0:T(1,128)}', space=vmem, size = 0x12000, scoped, tag = 'internal scratch']
  %s0 = inlined_call_operand.vmem [shape: f32[16,32], index: 0, kind: input, shape index: {}]
  %s1 = inlined_call_operand.vmem [shape: f32[32,16], index: 1, kind: input, shape index: {}]
  %s2 = inlined_call_operand.vmem [shape: f32[1,16], index: 2, kind: input, shape index: {}]
  %s3 = inlined_call_operand.vmem [shape: f32[16,32], index: 3, kind: input, shape index: {}]
  %s4 = inlined_call_operand.vmem [shape: f32[1,32], index: 4, kind: input, shape index: {}]
  %s5 = inlined_call_operand.vmem [shape: f32[1,32], index: 5, kind: input, shape index: {}]
  %s6 = inlined_call_operand.vmem [shape: f32[1,32], index: 6, kind: input, shape index: {}]
  %s7 = inlined_call_operand.hbm [shape: f32[16,32], index: 7, kind: output, shape index: {}]
  %s8 = sld [smem:[#allocation0]]
  $region61: #{tpu_custom_call.1} parent=0
    _
  %s10 = ssub.s32 1, %s8
  %s11 = scalar_select 0, %s10, %s8
  $region1: #{tpu_custom_call.1} parent=0
    #allocation2 [shape = 'u8[8192]{0}', space=vmem, size = 0x2000, scoped, tag = 'output window, operand 0']
    #allocation3 [shape = 's32[2]{0}', space=sflag, size = 0x8, scoped, tag = 'scoped memory for tpu_custom_call.1']
    %12 = vsyncpa [#allocation3], 0
    %s13 = scalar_lea.sflag [#allocation3], 1
    %14 = vsyncpa %s13, 0
    loop: start=0, step=1, limit=4
    $region2: #{tpu_custom_call.1} parent=1 // loop_pre_header
      _
    $region3: #{tpu_custom_call.1} parent=1 // loop_header
      %s16 = sphi 0, %s20
      %p17 = scmp.ge.s32.totalorder %s16, 4
      %s26 = sphi 0, %s28
      %s29 = sphi 0, %s26
      %s30 = sphi 0, %s29
      %s46 = sphi 0, %s30
      %s50 = sphi 0, %s50
      %s52 = sphi 0, %s50
      %s53 = sphi 0, %s52
      %s67 = sphi 0, %s53
      %s71 = sphi 0, %s71
      %s73 = sphi 0, %s71
      %s74 = sphi 0, %s73
      %s88 = sphi 0, %s74
      %s92 = sphi 0, %s92
      %s94 = sphi 0, %s92
      %s95 = sphi 0, %s94
      %s109 = sphi 0, %s95
      %s113 = sphi 0, %s113
      %s115 = sphi 0, %s113
      %s116 = sphi 0, %s115
      %s130 = sphi 0, %s116
      %s134 = sphi 0, %s134
      %s136 = sphi 0, %s134
      %s137 = sphi 0, %s136
      %s151 = sphi 0, %s137
      %s155 = sphi 0, %s155
      %s157 = sphi 0, %s155
      %s158 = sphi 0, %s157
      %s172 = sphi 0, %s158
      %s178 = sphi 0, %s180
      %s181 = sphi 0, %s178
      %s182 = sphi 0, %s181
      %s198 = sphi 0, %s182
    $region4: #{tpu_custom_call.1} parent=1 // loop_header_branch
      %19 = sbr.rel (%p17) target = $region8
    $region5: #{tpu_custom_call.1} parent=1 // loop_body
      %s21 = ssub.s32 %s16, 1
      %s22 = ssub.s32 %s16, 2
      %s23 = sadd.s32 %s16, 1
      %s24 = ssub.s32 %s16, %s23
      %p25 = scmp.eq.s32.totalorder %s24, 0
      %s27 = sadd.s32 %s26, 1
      %s28 = scalar_select %p25, %s26, %s27
      %p31 = pneg %p25
      %p32 = scmp.eq.s32.totalorder %s16, 1
      %p33 = por %p31, %p32
      %p34 = scmp.ne.s32.totalorder %s26, %s29
      %p35 = scmp.eq.s32.totalorder %s16, 0
      %p36 = por %p34, %p35
      %p37 = scmp.ne.s32.totalorder %s26, %s29
      %p38 = scmp.eq.s32.totalorder %s21, 1
      %p39 = por %p37, %p38
      %p40 = scmp.ne.s32.totalorder %s29, %s30
      %p41 = scmp.eq.s32.totalorder %s21, 0
      %p42 = por %p40, %p41
      %p43 = scmp.ne.s32.totalorder %s29, %s30
      %p44 = scmp.eq.s32.totalorder %s22, 1
      %p45 = por %p43, %p44
      %p47 = scmp.ne.s32.totalorder %s30, %s46
      %p48 = scmp.eq.s32.totalorder %s22, 0
      %p49 = por %p47, %p48
      %s51 = sadd.s32 %s50, 1
      %p54 = scmp.eq.s32.totalorder %s16, 1
      %p55 = scmp.ne.s32.totalorder %s50, %s52
      %p56 = scmp.eq.s32.totalorder %s16, 0
      %p57 = por %p55, %p56
      %p58 = scmp.ne.s32.totalorder %s50, %s52
      %p59 = scmp.eq.s32.totalorder %s21, 1
      %p60 = por %p58, %p59
      %p61 = scmp.ne.s32.totalorder %s52, %s53
      %p62 = scmp.eq.s32.totalorder %s21, 0
      %p63 = por %p61, %p62
      %p64 = scmp.ne.s32.totalorder %s52, %s53
      %p65 = scmp.eq.s32.totalorder %s22, 1
      %p66 = por %p64, %p65
      %p68 = scmp.ne.s32.totalorder %s53, %s67
      %p69 = scmp.eq.s32.totalorder %s22, 0
      %p70 = por %p68, %p69
      %s72 = sadd.s32 %s71, 1
      %p75 = scmp.eq.s32.totalorder %s16, 1
      %p76 = scmp.ne.s32.totalorder %s71, %s73
      %p77 = scmp.eq.s32.totalorder %s16, 0
      %p78 = por %p76, %p77
      %p79 = scmp.ne.s32.totalorder %s71, %s73
      %p80 = scmp.eq.s32.totalorder %s21, 1
      %p81 = por %p79, %p80
      %p82 = scmp.ne.s32.totalorder %s73, %s74
      %p83 = scmp.eq.s32.totalorder %s21, 0
      %p84 = por %p82, %p83
      %p85 = scmp.ne.s32.totalorder %s73, %s74
      %p86 = scmp.eq.s32.totalorder %s22, 1
      %p87 = por %p85, %p86
      %p89 = scmp.ne.s32.totalorder %s74, %s88
      %p90 = scmp.eq.s32.totalorder %s22, 0
      %p91 = por %p89, %p90
      %s93 = sadd.s32 %s92, 1
      %p96 = scmp.eq.s32.totalorder %s16, 1
      %p97 = scmp.ne.s32.totalorder %s92, %s94
      %p98 = scmp.eq.s32.totalorder %s16, 0
      %p99 = por %p97, %p98
      %p100 = scmp.ne.s32.totalorder %s92, %s94
      %p101 = scmp.eq.s32.totalorder %s21, 1
      %p102 = por %p100, %p101
      %p103 = scmp.ne.s32.totalorder %s94, %s95
      %p104 = scmp.eq.s32.totalorder %s21, 0
      %p105 = por %p103, %p104
      %p106 = scmp.ne.s32.totalorder %s94, %s95
      %p107 = scmp.eq.s32.totalorder %s22, 1
      %p108 = por %p106, %p107
      %p110 = scmp.ne.s32.totalorder %s95, %s109
      %p111 = scmp.eq.s32.totalorder %s22, 0
      %p112 = por %p110, %p111
      %s114 = sadd.s32 %s113, 1
      %p117 = scmp.eq.s32.totalorder %s16, 1
      %p118 = scmp.ne.s32.totalorder %s113, %s115
      %p119 = scmp.eq.s32.totalorder %s16, 0
      %p120 = por %p118, %p119
      %p121 = scmp.ne.s32.totalorder %s113, %s115
      %p122 = scmp.eq.s32.totalorder %s21, 1
      %p123 = por %p121, %p122
      %p124 = scmp.ne.s32.totalorder %s115, %s116
      %p125 = scmp.eq.s32.totalorder %s21, 0
      %p126 = por %p124, %p125
      %p127 = scmp.ne.s32.totalorder %s115, %s116
      %p128 = scmp.eq.s32.totalorder %s22, 1
      %p129 = por %p127, %p128
      %p131 = scmp.ne.s32.totalorder %s116, %s130
      %p132 = scmp.eq.s32.totalorder %s22, 0
      %p133 = por %p131, %p132
      %s135 = sadd.s32 %s134, 1
      %p138 = scmp.eq.s32.totalorder %s16, 1
      %p139 = scmp.ne.s32.totalorder %s134, %s136
      %p140 = scmp.eq.s32.totalorder %s16, 0
      %p141 = por %p139, %p140
      %p142 = scmp.ne.s32.totalorder %s134, %s136
      %p143 = scmp.eq.s32.totalorder %s21, 1
      %p144 = por %p142, %p143
      %p145 = scmp.ne.s32.totalorder %s136, %s137
      %p146 = scmp.eq.s32.totalorder %s21, 0
      %p147 = por %p145, %p146
      %p148 = scmp.ne.s32.totalorder %s136, %s137
      %p149 = scmp.eq.s32.totalorder %s22, 1
      %p150 = por %p148, %p149
      %p152 = scmp.ne.s32.totalorder %s137, %s151
      %p153 = scmp.eq.s32.totalorder %s22, 0
      %p154 = por %p152, %p153
      %s156 = sadd.s32 %s155, 1
      %p159 = scmp.eq.s32.totalorder %s16, 1
      %p160 = scmp.ne.s32.totalorder %s155, %s157
      %p161 = scmp.eq.s32.totalorder %s16, 0
      %p162 = por %p160, %p161
      %p163 = scmp.ne.s32.totalorder %s155, %s157
      %p164 = scmp.eq.s32.totalorder %s21, 1
      %p165 = por %p163, %p164
      %p166 = scmp.ne.s32.totalorder %s157, %s158
      %p167 = scmp.eq.s32.totalorder %s21, 0
      %p168 = por %p166, %p167
      %p169 = scmp.ne.s32.totalorder %s157, %s158
      %p170 = scmp.eq.s32.totalorder %s22, 1
      %p171 = por %p169, %p170
      %p173 = scmp.ne.s32.totalorder %s158, %s172
      %p174 = scmp.eq.s32.totalorder %s22, 0
      %p175 = por %p173, %p174
      %s176 = ssub.s32 %s16, %s23
      %p177 = scmp.eq.s32.totalorder %s176, 0
      %s179 = sadd.s32 %s178, 1
      %s180 = scalar_select %p177, %s178, %s179
      %p183 = pneg %p177
      %p184 = scmp.eq.s32.totalorder %s16, 1
      %p185 = por %p183, %p184
      %p186 = scmp.ne.s32.totalorder %s178, %s181
      %p187 = scmp.eq.s32.totalorder %s16, 0
      %p188 = por %p186, %p187
      %p189 = scmp.ne.s32.totalorder %s178, %s181
      %p190 = scmp.eq.s32.totalorder %s21, 1
      %p191 = por %p189, %p190
      %p192 = scmp.ne.s32.totalorder %s181, %s182
      %p193 = scmp.eq.s32.totalorder %s21, 0
      %p194 = por %p192, %p193
      %p195 = scmp.ne.s32.totalorder %s181, %s182
      %p196 = scmp.eq.s32.totalorder %s22, 1
      %p197 = por %p195, %p196
      %p199 = scmp.ne.s32.totalorder %s182, %s198
      %p200 = scmp.eq.s32.totalorder %s22, 0
      %p201 = por %p199, %p200
      %p202 = scmp.le.s32.totalorder 1, %s16
      %p203 = scmp.lt.s32.totalorder %s16, 3
      %p204 = pnand %p202, %p203
      %p205 = pneg %p204
      // Predicated region
      $region9: #{tpu_custom_call.1} parent=5 // pred_check
        _
      $region10: #{tpu_custom_call.1} parent=5 // pred_check_branch
        %207 = sbr.rel (%p204) target = $region12
      $region11: #{tpu_custom_call.1} parent=5 // pred_region
        %s208 = ssub.s32 %s16, 1
        // Predicated region
        $region13: #{tpu_custom_call.1} parent=11 // pred_check
          %p209 = pneg %p63
        $region14: #{tpu_custom_call.1} parent=11 // pred_check_branch
          %211 = sbr.rel (%p209) target = $region16
        $region15: #{tpu_custom_call.1} parent=11 // pred_region
          _
        $region16: #{tpu_custom_call.1} parent=11 // pred_fallthru
          _
        // Predicated region
        $region17: #{tpu_custom_call.1} parent=11 // pred_check
          %p212 = pneg %p84
        $region18: #{tpu_custom_call.1} parent=11 // pred_check_branch
          %214 = sbr.rel (%p212) target = $region20
        $region19: #{tpu_custom_call.1} parent=11 // pred_region
          _
        $region20: #{tpu_custom_call.1} parent=11 // pred_fallthru
          _
        // Predicated region
        $region21: #{tpu_custom_call.1} parent=11 // pred_check
          %p215 = pneg %p105
        $region22: #{tpu_custom_call.1} parent=11 // pred_check_branch
          %217 = sbr.rel (%p215) target = $region24
        $region23: #{tpu_custom_call.1} parent=11 // pred_region
          _
        $region24: #{tpu_custom_call.1} parent=11 // pred_fallthru
          _
        // Predicated region
        $region25: #{tpu_custom_call.1} parent=11 // pred_check
          %p218 = pneg %p126
        $region26: #{tpu_custom_call.1} parent=11 // pred_check_branch
          %220 = sbr.rel (%p218) target = $region28
        $region27: #{tpu_custom_call.1} parent=11 // pred_region
          _
        $region28: #{tpu_custom_call.1} parent=11 // pred_fallthru
          _
        // Predicated region
        $region29: #{tpu_custom_call.1} parent=11 // pred_check
          %p221 = pneg %p147
        $region30: #{tpu_custom_call.1} parent=11 // pred_check_branch
          %223 = sbr.rel (%p221) target = $region32
        $region31: #{tpu_custom_call.1} parent=11 // pred_region
          _
        $region32: #{tpu_custom_call.1} parent=11 // pred_fallthru
          _
        // Predicated region
        $region33: #{tpu_custom_call.1} parent=11 // pred_check
          %p224 = pneg %p168
        $region34: #{tpu_custom_call.1} parent=11 // pred_check_branch
          %226 = sbr.rel (%p224) target = $region36
        $region35: #{tpu_custom_call.1} parent=11 // pred_region
          _
        $region36: #{tpu_custom_call.1} parent=11 // pred_fallthru
          _
      $region12: #{tpu_custom_call.1} parent=5 // pred_fallthru
        _
      %p227 = scmp.lt.s32.totalorder %s16, 2
      // Predicated region
      $region37: #{tpu_custom_call.1} parent=5 // pred_check
        %p228 = pneg %p227
      $region38: #{tpu_custom_call.1} parent=5 // pred_check_branch
        %230 = sbr.rel (%p228) target = $region40
      $region39: #{tpu_custom_call.1} parent=5 // pred_region
        // Predicated region
        $region41: #{tpu_custom_call.1} parent=39 // pred_check
          %p231 = pneg %p36
        $region42: #{tpu_custom_call.1} parent=39 // pred_check_branch
          %233 = sbr.rel (%p231) target = $region44
        $region43: #{tpu_custom_call.1} parent=39 // pred_region
          %p234 = scmp.lt.s32.totalorder %s16, 1
          %s235 = scalar_select %p234, %s16, 1
          %s236 = smul.addr %s235, 8
          %s237 = scalar_lea.vmem %s0, %s236
        $region44: #{tpu_custom_call.1} parent=39 // pred_fallthru
          _
      $region40: #{tpu_custom_call.1} parent=5 // pred_fallthru
        _
      %p238 = scmp.le.s32.totalorder 1, %s16
      %p239 = scmp.lt.s32.totalorder %s16, 3
      %p240 = pnand %p238, %p239
      %p241 = pneg %p240
      // Predicated region
      $region45: #{tpu_custom_call.1} parent=5 // pred_check
        _
      $region46: #{tpu_custom_call.1} parent=5 // pred_check_branch
        %243 = sbr.rel (%p240) target = $region48
      $region47: #{tpu_custom_call.1} parent=5 // pred_region
        %s244 = ssub.s32 %s16, 1
        %p245 = scmp.lt.s32.totalorder %s21, 1
        %s246 = scalar_select %p245, %s21, 1
        %s247 = smul.addr %s246, 8
        %s248 = scalar_lea.vmem %s0, %s247
        %p249 = pneg %p42
        %p250 = pneg %p39
        %p251 = pneg %p63
        %p252 = pneg %p60
        %p253 = pneg %p84
        %p254 = pneg %p81
        %p255 = pneg %p105
        %p256 = pneg %p102
        %p257 = pneg %p126
        %p258 = pneg %p123
        %p259 = pneg %p147
        %p260 = pneg %p144
        %p261 = pneg %p168
        %p262 = pneg %p165
        %p263 = pneg %p194
        %p264 = pneg %p191
        %s265 = sand.u32 %s181, 1
        %s266 = scalar_lea.sflag [#allocation3], %s265
        %s267 = sand.u32 %s181, 1
        %s268 = smul.addr %s267, 8
        %s269 = scalar_lea.vmem [#allocation2], %s268
        %p270 = scmp.lt.s32.totalorder %s21, 1
        %s271 = scalar_select %p270, %s21, 1
        %s272 = smul.addr %s271, 8
        %s273 = scalar_lea.vmem %s0, %s272
        %v274 = vld [vmem:[%s273] sm:$0xff]
        %v275 = vld [vmem:[%s1] sm:$0xff]
        %v276 = vld [vmem:[%s1 + $0x8] sm:$0xff]
        %v277 = vld [vmem:[%s1 + $0x10] sm:$0xff]
        %v278 = vld [vmem:[%s1 + $0x18] sm:$0xff]
        %v279 = vld [vmem:[%s2] sm:$0x1]
        %v281 = vlaneseq
        %v282 = vshrl.u32 %v281, 7
        %v283 = vsub.s32 0, %v282
        %v284 = vrot.slane %v279, %v283
        %vm286 = vcmask 261120
        %v288 = vsel %vm286, %v274, 0
        %290 = vmatprep.subr.mxu0 0.0
        %291 = vmatpush1.msra.mxu0 %v275
        %292 = vmatprep.subr.mxu0 0.0
        %293 = vmatpush1.msra.mxu0 %v276
        %294 = vmatprep.subr.mxu0 0.0
        %295 = vmatpush1.msra.mxu0 %v277
        %296 = vmatprep.subr.mxu0 0.0
        %297 = vmatpush1.msra.mxu0 %v278
        %298 = vmatprep.subr.mxu0 0.0
        %299 = vmatpush1.msra.mxu0 0.0
        %300 = vmatprep.subr.mxu0 0.0
        %301 = vmatpush1.msra.mxu0 0.0
        %302 = vmatprep.subr.mxu0 0.0
        %303 = vmatpush1.msra.mxu0 0.0
        %304 = vmatprep.subr.mxu0 0.0
        %305 = vmatpush1.msra.mxu0 0.0
        %306 = vmatprep.subr.mxu0 0.0
        %307 = vmatpush1.msra.mxu0 0.0
        %308 = vmatprep.subr.mxu0 0.0
        %309 = vmatpush1.msra.mxu0 0.0
        %310 = vmatprep.subr.mxu0 0.0
        %311 = vmatpush1.msra.mxu0 0.0
        %312 = vmatprep.subr.mxu0 0.0
        %313 = vmatpush1.msra.mxu0 0.0
        %314 = vmatprep.subr.mxu0 0.0
        %315 = vmatpush1.msra.mxu0 0.0
        %316 = vmatprep.subr.mxu0 0.0
        %317 = vmatpush1.msra.mxu0 0.0
        %318 = vmatprep.subr.mxu0 0.0
        %319 = vmatpush1.msra.mxu0 0.0
        %320 = vmatprep.subr.mxu0 0.0
        %321 = vmatpush1.msra.mxu0 0.0
        %322 = vmatprep.subr.mxu0 0.0
        %323 = vmatpush1.msra.mxu0 0.0
        %324 = vmatprep.subr.mxu0 0.0
        %325 = vmatpush1.msra.mxu0 0.0
        %326 = vmatprep.subr.mxu0 0.0
        %327 = vmatpush1.msra.mxu0 0.0
        %328 = vmatprep.subr.mxu0 0.0
        %329 = vmatpush1.msra.mxu0 0.0
        %330 = vmatprep.subr.mxu0 0.0
        %331 = vmatpush1.msra.mxu0 0.0
        %332 = vmatprep.subr.mxu0 0.0
        %333 = vmatpush1.msra.mxu0 0.0
        %334 = vmatprep.subr.mxu0 0.0
        %335 = vmatpush1.msra.mxu0 0.0
        %336 = vmatprep.subr.mxu0 0.0
        %337 = vmatpush1.msra.mxu0 0.0
        %338 = vmatprep.subr.mxu0 0.0
        %339 = vmatpush1.msra.mxu0 0.0
        %340 = vmatprep.subr.mxu0 0.0
        %341 = vmatpush1.msra.mxu0 0.0
        %342 = vmatprep.subr.mxu0 0.0
        %343 = vmatpush1.msra.mxu0 0.0
        %344 = vmatprep.subr.mxu0 0.0
        %345 = vmatpush1.msra.mxu0 0.0
        %346 = vmatprep.subr.mxu0 0.0
        %347 = vmatpush1.msra.mxu0 0.0
        %348 = vmatprep.subr.mxu0 0.0
        %349 = vmatpush1.msra.mxu0 0.0
        %350 = vmatprep.subr.mxu0 0.0
        %351 = vmatpush1.msra.mxu0 0.0
        %352 = vmatprep.subr.mxu0 0.0
        %353 = vmatpush1.msra.mxu0 0.0
        %354 = vmatprep.mubr.f32.mxu0 0.0
        %355 = vmatmul.mubr.f32.gmra.mrb[0].mxu0 %v288
        %v356 = vpop.f32.mrb[0].mxu0
        %v357 = vadd.f32 %v284, %v356
        %v358 = vpop.f32.mrb[0].mxu0
        %359 = vdwg.mxu0
        %v360 = vmax.f32 %v357, 0.0
        %v361 = vld [vmem:[%s3] sm:$0xff]
        %v362 = vld [vmem:[%s3 + $0x8] sm:$0xff]
        %v363 = vld [vmem:[%s4] sm:$0x1]
        %v365 = vlaneseq
        %v366 = vshrl.u32 %v365, 7
        %v367 = vsub.s32 0, %v366
        %v368 = vrot.slane %v363, %v367
        %vm370 = vcmask 130048
        %v372 = vsel %vm370, %v360, 0
        %374 = vmatprep.subr.mxu0 0.0
        %375 = vmatpush1.msra.mxu0 %v361
        %376 = vmatprep.subr.mxu0 0.0
        %377 = vmatpush1.msra.mxu0 %v362
        %378 = vmatprep.subr.mxu0 0.0
        %379 = vmatpush1.msra.mxu0 0.0
        %380 = vmatprep.subr.mxu0 0.0
        %381 = vmatpush1.msra.mxu0 0.0
        %382 = vmatprep.subr.mxu0 0.0
        %383 = vmatpush1.msra.mxu0 0.0
        %384 = vmatprep.subr.mxu0 0.0
        %385 = vmatpush1.msra.mxu0 0.0
        %386 = vmatprep.subr.mxu0 0.0
        %387 = vmatpush1.msra.mxu0 0.0
        %388 = vmatprep.subr.mxu0 0.0
        %389 = vmatpush1.msra.mxu0 0.0
        %390 = vmatprep.subr.mxu0 0.0
        %391 = vmatpush1.msra.mxu0 0.0
        %392 = vmatprep.subr.mxu0 0.0
        %393 = vmatpush1.msra.mxu0 0.0
        %394 = vmatprep.subr.mxu0 0.0
        %395 = vmatpush1.msra.mxu0 0.0
        %396 = vmatprep.subr.mxu0 0.0
        %397 = vmatpush1.msra.mxu0 0.0
        %398 = vmatprep.subr.mxu0 0.0
        %399 = vmatpush1.msra.mxu0 0.0
        %400 = vmatprep.subr.mxu0 0.0
        %401 = vmatpush1.msra.mxu0 0.0
        %402 = vmatprep.subr.mxu0 0.0
        %403 = vmatpush1.msra.mxu0 0.0
        %404 = vmatprep.subr.mxu0 0.0
        %405 = vmatpush1.msra.mxu0 0.0
        %406 = vmatprep.subr.mxu0 0.0
        %407 = vmatpush1.msra.mxu0 0.0
        %408 = vmatprep.subr.mxu0 0.0
        %409 = vmatpush1.msra.mxu0 0.0
        %410 = vmatprep.subr.mxu0 0.0
        %411 = vmatpush1.msra.mxu0 0.0
        %412 = vmatprep.subr.mxu0 0.0
        %413 = vmatpush1.msra.mxu0 0.0
        %414 = vmatprep.subr.mxu0 0.0
        %415 = vmatpush1.msra.mxu0 0.0
        %416 = vmatprep.subr.mxu0 0.0
        %417 = vmatpush1.msra.mxu0 0.0
        %418 = vmatprep.subr.mxu0 0.0
        %419 = vmatpush1.msra.mxu0 0.0
        %420 = vmatprep.subr.mxu0 0.0
        %421 = vmatpush1.msra.mxu0 0.0
        %422 = vmatprep.subr.mxu0 0.0
        %423 = vmatpush1.msra.mxu0 0.0
        %424 = vmatprep.subr.mxu0 0.0
        %425 = vmatpush1.msra.mxu0 0.0
        %426 = vmatprep.subr.mxu0 0.0
        %427 = vmatpush1.msra.mxu0 0.0
        %428 = vmatprep.subr.mxu0 0.0
        %429 = vmatpush1.msra.mxu0 0.0
        %430 = vmatprep.subr.mxu0 0.0
        %431 = vmatpush1.msra.mxu0 0.0
        %432 = vmatprep.subr.mxu0 0.0
        %433 = vmatpush1.msra.mxu0 0.0
        %434 = vmatprep.subr.mxu0 0.0
        %435 = vmatpush1.msra.mxu0 0.0
        %436 = vmatprep.subr.mxu0 0.0
        %437 = vmatpush1.msra.mxu0 0.0
        %438 = vmatprep.mubr.f32.mxu0 0.0
        %439 = vmatmul.mubr.f32.gmra.mrb[0].mxu0 %v372
        %v440 = vpop.f32.mrb[0].mxu0
        %v441 = vadd.f32 %v368, %v440
        %v442 = vpop.f32.mrb[0].mxu0
        %443 = vdwg.mxu0
        %v444 = vsel %vm286, %v441, 0.0
        %445 = vadd.xlane.f32.xlu0 %v444
        %v446 = vpop.xlane.xlu0 %445
        %v447 = vrcp.pop 32.0
        %v448 = vmul.f32 %v446, %v447
        %v449 = vsub.f32 %v441, %v448
        %v450 = vmul.f32 %v449, %v449
        %v451 = vsel %vm286, %v450, 0.0
        %452 = vadd.xlane.f32.xlu0 %v451
        %v453 = vpop.xlane.xlu0 %452
        %v454 = vmul.f32 %v453, %v447
        %v455 = vadd.f32 %v454, 1e-05
        %v456 = vrsqrt.pop %v455
        %v457 = vld [vmem:[%s5] sm:$0x1]
        %v459 = vlaneseq
        %v460 = vshrl.u32 %v459, 7
        %v461 = vsub.s32 0, %v460
        %v462 = vrot.slane %v457, %v461
        %v464 = vmul.f32 %v456, %v462
        %v465 = vmul.f32 %v449, %v464
        %v466 = vld [vmem:[%s6] sm:$0x1]
        %v468 = vlaneseq
        %v469 = vshrl.u32 %v468, 7
        %v470 = vsub.s32 0, %v469
        %v471 = vrot.slane %v466, %v470
        %v473 = vadd.f32 %v465, %v471
        %474 = vst.msk [vmem:[%s269] sm:$0xff] %vm286, %v473
        %s475 = sand.u32 %s181, 1
        %s476 = scalar_lea.sflag [#allocation3], %s475
        %s477 = sand.u32 %s181, 1
        %s478 = smul.addr %s477, 8
        %s479 = scalar_lea.vmem [#allocation2], %s478
        // Predicated region
        $region49: #{tpu_custom_call.1} parent=47 // pred_check
          %p480 = pneg %p191
        $region50: #{tpu_custom_call.1} parent=47 // pred_check_branch
          %482 = sbr.rel (%p480) target = $region52
        $region51: #{tpu_custom_call.1} parent=47 // pred_region
          %s484 = ssub.s32 128, 128
          %485 = vsyncadd %s476, %s484
          %s486 = smul.addr %s21, 128
          %s487 = scalar_lea.hbm %s7, %s486
          %s489 = sshll.u32 %s479, 4
          %s490 = int_to_ptr.vmem [resolvable:$true] %s489
          %492 = dma.vmem_to_hbm [thread:$0]  %s490, 128, %s487, %s476
        $region52: #{tpu_custom_call.1} parent=47 // pred_fallthru
          _
      $region48: #{tpu_custom_call.1} parent=5 // pred_fallthru
        _
      %p493 = scmp.le.s32.totalorder 2, %s16
      // Predicated region
      $region53: #{tpu_custom_call.1} parent=5 // pred_check
        %p494 = pneg %p493
      $region54: #{tpu_custom_call.1} parent=5 // pred_check_branch
        %496 = sbr.rel (%p494) target = $region56
      $region55: #{tpu_custom_call.1} parent=5 // pred_region
        %s497 = ssub.s32 %s16, 2
        // Predicated region
        $region57: #{tpu_custom_call.1} parent=55 // pred_check
          %p498 = pneg %p197
        $region58: #{tpu_custom_call.1} parent=55 // pred_check_branch
          %500 = sbr.rel (%p498) target = $region60
        $region59: #{tpu_custom_call.1} parent=55 // pred_region
          %s501 = sand.u32 %s182, 1
          %s502 = scalar_lea.sflag [#allocation3], %s501
          %s503 = sand.u32 %s182, 1
          %s504 = smul.addr %s503, 8
          %s505 = scalar_lea.vmem [#allocation2], %s504
          %506 = dma.done %s502, 128
        $region60: #{tpu_custom_call.1} parent=55 // pred_fallthru
          _
      $region56: #{tpu_custom_call.1} parent=5 // pred_fallthru
        _
    $region6: #{tpu_custom_call.1} parent=1 // loop_footer
      %s20 = sadd.s32 1, %s16
    $region7: #{tpu_custom_call.1} parent=1 // loop_footer_branch
      %15 = sbr.rel target = $region3
    $region8: #{tpu_custom_call.1} parent=1 // loop_exit
      _
    %507 = vsyncpa [#allocation3], 1
    %s508 = scalar_lea.sflag [#allocation3], 1
    %509 = vsyncpa %s508, 1

</llo_original>
